<compile_context>
chip_gen: v7x
topology: tpu7x:2x2x1
jax: 0.10.0
libtpu: 0.0.40
codegen_flags: <defaults>
</compile_context>

<pallas_src>
import jax
import jax.numpy as jnp
from jax.experimental import pallas as pl
from jax.experimental.pallas import tpu as pltpu


# ---------------------------------------------------------------------------
# Fast path: identity forward -> no kernel, no HBM traffic.
# ---------------------------------------------------------------------------
def node_predictor_forward(x, *, training: bool = False):
    """NodePredictor.forward: pure identity on x (the early `return x`).

    `training` has no effect (forward is identical in train/eval)."""
    del training
    return x


# ---------------------------------------------------------------------------
# Optional explicit-materialization path: lane-dense streaming copy kernel,
# used only when a distinct output buffer is required.
# ---------------------------------------------------------------------------
def _copy_kernel(x_ref, o_ref):
    # (TM, C) tile with C a multiple of 128 on the lane axis -> unmasked,
    # lane-dense vector stores.
    o_ref[...] = x_ref[...]


def _sublane_pack(itemsize):
    # Rows per packed sublane group: f32 -> 8, bf16/f16 -> 16, int8/fp8 -> 32.
    return max(8, 8 * (4 // max(1, itemsize)))


def _round_up(v, m):
    return ((v + m - 1) // m) * m


def _pick_lane_width(total, cap=4096):
    """Largest power-of-two multiple of 128 dividing `total` (capped).
    Returns 0 if total is not divisible by 128 (caller falls back)."""
    if total % 128 != 0:
        return 0
    c, k = 128, total // 128
    while (k % 2 == 0) and (c * 2 <= cap):
        c *= 2
        k //= 2
    return c


def _pick_block_rows(n_rows, n_cols, itemsize, vmem_budget_bytes):
    """Largest row tile whose double-buffered in+out footprint fits the
    budget. Accounts for lane padding (cols rounded up to 128) and sublane
    packing (rows aligned to the dtype pack factor)."""
    pack = _sublane_pack(itemsize)
    padded_cols = _round_up(n_cols, 128)
    # 2 input buffers + 2 output buffers resident in VMEM.
    per_row_bytes = 4 * padded_cols * itemsize
    tm = max(pack, vmem_budget_bytes // per_row_bytes)
    tm = max(pack, (tm // pack) * pack)
    if tm >= n_rows:
        return n_rows  # single block == full array dim (always legal)
    return tm


def node_predictor_forward_copy(x, *, vmem_budget_bytes=16 << 20):
    """Identity forward that materializes a distinct output buffer via a
    lane-dense Pallas streaming copy."""
    orig_shape = x.shape
    total = int(x.size)
    itemsize = x.dtype.itemsize

    lane = _pick_lane_width(total)
    if lane:
        rows = total // lane
        x2 = x.reshape(rows, lane)
    else:
        # Fallback: element count not a multiple of 128; keep the trailing
        # dim on the lane axis (may emit masked stores if it is narrow).
        x2 = x.reshape(-1, orig_shape[-1]) if x.ndim >= 2 else x.reshape(1, -1)
        rows, lane = x2.shape

    tm = _pick_block_rows(rows, lane, itemsize, vmem_budget_bytes)
    grid = (pl.cdiv(rows, tm),)

    out = pl.pallas_call(
        _copy_kernel,
        out_shape=jax.ShapeDtypeStruct((rows, lane), x.dtype),
        grid_spec=pltpu.PrefetchScalarGridSpec(
            num_scalar_prefetch=0,
            grid=grid,
            in_specs=[pl.BlockSpec((tm, lane), lambda i: (i, 0))],
            out_specs=pl.BlockSpec((tm, lane), lambda i: (i, 0)),
        ),
        compiler_params=pltpu.CompilerParams(
            # TODO(synk): on v7x, consider pltpu.CORE_PARALLEL (or pl.core_map
            # over a TensorCore mesh) to shard the row axis across both TCs;
            # "parallel" is kept here for portability on single-TC v5e/v6e.
            dimension_semantics=("parallel",),
            # Explicit scoped-VMEM limit: tile sizing above already accounts
            # for lane/sublane padding; 32 MiB is safe on v5e/v6e/v7x and
            # keeps the pipeline genuinely double-buffered.
            vmem_limit_bytes=32 << 20,
        ),
    )(x2)
    return out.reshape(orig_shape)


# ---------------------------------------------------------------------------
# Parameter init for parity with the PyTorch module's __init__ (the Linear
# layers / dropout are never used by forward).
# ---------------------------------------------------------------------------
def init_node_predictor_params(key, in_channels, hidden_channels, out_channels,
                               num_layers):
    dims = [in_channels] + [hidden_channels] * (num_layers - 1) + [out_channels]
    params = []
    for li in range(num_layers):
        fan_in, fan_out = dims[li], dims[li + 1]
        key, kw, kb = jax.random.split(key, 3)
        bound = 1.0 / jnp.sqrt(fan_in)
        w = jax.random.uniform(kw, (fan_out, fan_in), jnp.float32, -bound, bound)
        b = jax.random.uniform(kb, (fan_out,), jnp.float32, -bound, bound)
        params.append({"weight": w, "bias": b})
    return params


if __name__ == "__main__":
    key = jax.random.PRNGKey(0)

    in_channels, hidden_channels, out_channels, num_layers, dropout = 32, 32, 1, 3, 0.5

    # Parameters mirrored from __init__ for parity (unused by forward).
    _params = init_node_predictor_params(
        jax.random.PRNGKey(0), in_channels, hidden_channels, out_channels, num_layers
    )

    # Small node-feature matrix consistent with the module (D = in_channels).
    N, D = 64, in_channels
    key, kx = jax.random.split(key)
    x = jax.random.normal(kx, (N, D), jnp.float32)

    # 1) Default fast path: identity forward, no kernel launched.
    y = jax.block_until_ready(node_predictor_forward(x, training=False))
    assert y.shape == x.shape and y.dtype == x.dtype
    assert jnp.array_equal(y, x)

    # 2) Explicit-copy path: lane-dense Pallas streaming copy into a distinct
    #    output buffer; verified bit-exact against the input.
    y_copy = jax.block_until_ready(node_predictor_forward_copy(x))
    assert y_copy.shape == x.shape and y_copy.dtype == x.dtype
    assert jnp.array_equal(y_copy, x)

    print("KERNEL_OK")
</pallas_src>

<mosaic_0001>
module attributes {stable_mosaic.version = 11 : i64} {
  func.func @_copy_kernel(%arg0: i32, %arg1: memref<1x2048xf32, #tpu.memory_space<vmem>>, %arg2: memref<1x2048xf32, #tpu.memory_space<vmem>>) attributes {dimension_semantics = [#tpu.dimension_semantics<parallel>], iteration_bounds = array<i64: 1>, scalar_prefetch = 0 : i64, scratch_operands = 0 : i64, tpu.core_type = #tpu.core_type<tc>, window_params = [{transform_indices = @transform_0, window_bounds = array<i64: 1, 2048>}, {transform_indices = @transform_1, window_bounds = array<i64: 1, 2048>}]} {
    %c0 = arith.constant 0 : index
    %c0_0 = arith.constant 0 : index
    %0 = vector.load %arg1[%c0, %c0_0] : memref<1x2048xf32, #tpu.memory_space<vmem>>, vector<1x2048xf32>
    %c0_1 = arith.constant 0 : index
    %c0_2 = arith.constant 0 : index
    %1 = vector.load %arg2[%c0_1, %c0_2] : memref<1x2048xf32, #tpu.memory_space<vmem>>, vector<1x2048xf32>
    tpu.vector_store %arg2[%c0_1, %c0_2], %0 {strides = array<i32>} : memref<1x2048xf32, #tpu.memory_space<vmem>>, vector<1x2048xf32>,
    return
  }
  func.func @transform_0(%arg0: i32) -> (i32, i32) {
    %c0_i32 = arith.constant 0 : i32
    %c0_i32_0 = arith.constant 0 : i32
    return %arg0, %c0_i32 : i32, i32
  }
  func.func @transform_1(%arg0: i32) -> (i32, i32) {
    %c0_i32 = arith.constant 0 : i32
    %c0_i32_0 = arith.constant 0 : i32
    return %arg0, %c0_i32 : i32, i32
  }
}

</mosaic_0001>

<llo_original>
// kernel: tpu_custom_call.1
$region0: #{tpu_custom_call.1}
  #allocation0 [shape = 'u32[]', space=smem, size = 0x4, offset = 0x4, fixed_abs, tag = 'smem constant byte address 0x4 - core index']
  #allocation1 [shape = 'u32[144,128]{1,0:T(1,128)}', space=vmem, size = 0x12000, scoped, tag = 'internal scratch']
  %s0 = inlined_call_operand.hbm [shape: f32[1,2048], index: 0, kind: input, shape index: {}]
  %s1 = inlined_call_operand.hbm [shape: f32[1,2048], index: 1, kind: output, shape index: {}]
  %s2 = sld [smem:[#allocation0]]
  $region18: #{tpu_custom_call.1} parent=0
    _
  %s4 = ssub.s32 1, %s2
  %s5 = scalar_select 0, %s4, %s2
  $region1: #{tpu_custom_call.1} parent=0
    #allocation2 [shape = 'u8[8192]{0}', space=vmem, size = 0x2000, scoped, tag = 'input window, operand 0, single buffered']
    #allocation3 [shape = 's32[1]{0}', space=sflag, size = 0x4, scoped, tag = 'scoped memory for tpu_custom_call.1']
    #allocation4 [shape = 's32[1]{0}', space=sflag, size = 0x4, scoped, tag = 'scoped memory for tpu_custom_call.1']
    #allocation5 [shape = 'u8[8192]{0}', space=vmem, size = 0x2000, scoped, tag = 'output window, operand 0, single buffered']
    %6 = vsyncpa [#allocation3], 0
    %7 = vsyncpa [#allocation4], 0
    // Predicated region
    $region2: #{tpu_custom_call.1} parent=1 // pred_check
      _
    $region3: #{tpu_custom_call.1} parent=1 // pred_check_branch
      %9 = sbr.rel (0) target = $region5
    $region4: #{tpu_custom_call.1} parent=1 // pred_region
      %s11 = ssub.s32 256, 256
      %12 = vsyncadd [#allocation3], %s11
      %s14 = sshll.u32 [#allocation2], 4
      %s15 = int_to_ptr.vmem [resolvable:$true] %s14
      %17 = dma.hbm_to_vmem [thread:$0]  %s0, 256, %s15, [#allocation3]
    $region5: #{tpu_custom_call.1} parent=1 // pred_fallthru
      _
    // Predicated region
    $region6: #{tpu_custom_call.1} parent=1 // pred_check
      _
    $region7: #{tpu_custom_call.1} parent=1 // pred_check_branch
      %19 = sbr.rel (0) target = $region9
    $region8: #{tpu_custom_call.1} parent=1 // pred_region
      %20 = dma.done [#allocation3], 256
    $region9: #{tpu_custom_call.1} parent=1 // pred_fallthru
      _
    %v21 = vld [vmem:[#allocation2] sm:$0xff]
    %v22 = vld [vmem:[#allocation2 + $0x8] sm:$0xff]
    %23 = vst [vmem:[#allocation5] sm:$0xff] %v21
    %24 = vst [vmem:[#allocation5 + $0x8] sm:$0xff] %v22
    // Predicated region
    $region10: #{tpu_custom_call.1} parent=1 // pred_check
      _
    $region11: #{tpu_custom_call.1} parent=1 // pred_check_branch
      %26 = sbr.rel (0) target = $region13
    $region12: #{tpu_custom_call.1} parent=1 // pred_region
      %s28 = ssub.s32 256, 256
      %29 = vsyncadd [#allocation4], %s28
      %s31 = sshll.u32 [#allocation5], 4
      %s32 = int_to_ptr.vmem [resolvable:$true] %s31
      %34 = dma.vmem_to_hbm [thread:$0]  %s32, 256, %s1, [#allocation4]
    $region13: #{tpu_custom_call.1} parent=1 // pred_fallthru
      _
    // Predicated region
    $region14: #{tpu_custom_call.1} parent=1 // pred_check
      _
    $region15: #{tpu_custom_call.1} parent=1 // pred_check_branch
      %36 = sbr.rel (0) target = $region17
    $region16: #{tpu_custom_call.1} parent=1 // pred_region
      %37 = dma.done [#allocation4], 256
    $region17: #{tpu_custom_call.1} parent=1 // pred_fallthru
      _
    %38 = vsyncpa [#allocation3], 1
    %39 = vsyncpa [#allocation4], 1

</llo_original>
